<compile_context>
chip_gen: v6e
topology: v6e:2x2x1
jax: 0.10.0
libtpu: 0.0.40
codegen_flags: <defaults>
</compile_context>

<pallas_src>
import jax
import jax.numpy as jnp
from jax.experimental import pallas as pl
from jax.experimental.pallas import tpu as pltpu


def _sim_kernel(w0_ref, w1_ref, h0_ref, h_ref, o_ref):
    # h0_ref/h_ref: (MB, N, Dh) f32 blocks; w0_ref/w1_ref: (1, Dh) f32.
    z0 = h0_ref[...]
    z1 = h_ref[...]
    dh = z0.shape[-1]
    d = 2 * dh

    # Row stats over the *virtual* concatenation [z0 | z1] along features.
    mean = (jnp.sum(z0, axis=-1, keepdims=True) +
            jnp.sum(z1, axis=-1, keepdims=True)) * jnp.float32(1.0 / d)
    zc0 = z0 - mean
    zc1 = z1 - mean
    # Unbiased variance (matches torch.std(unbiased=True)).
    var = (jnp.sum(zc0 * zc0, axis=-1, keepdims=True) +
           jnp.sum(zc1 * zc1, axis=-1, keepdims=True)) * jnp.float32(1.0 / (d - 1))
    inv_std = jax.lax.rsqrt(var)            # EUP rsqrt; divide becomes a multiply
    zn0 = zc0 * inv_std
    zn1 = zc1 * inv_std

    w0 = w0_ref[...].reshape(1, 1, dh)      # diag(weight) folded into an
    w1 = w1_ref[...].reshape(1, 1, dh)      # elementwise scale per half

    # sim = (zn * w) @ zn^T, split over the two feature halves; contraction
    # is on the last dim of both operands -> no explicit transpose.
    acc = jnp.einsum('bnd,bkd->bnk', zn0 * w0, zn0,
                     preferred_element_type=jnp.float32)
    acc = acc + jnp.einsum('bnd,bkd->bnk', zn1 * w1, zn1,
                           preferred_element_type=jnp.float32)
    o_ref[...] = acc


def _pick_mb(M, N, D, budget_bytes=8 << 20):
    """Batch-block size: amortize per-step overhead, stay well inside VMEM,
    and (when M > 1) keep at least 2 grid steps for megacore sharding."""
    per_batch = (N * D + N * N) * 4 * 2      # f32, double-buffered in/out
    cap = max(1, budget_bytes // max(per_batch, 1))
    divisors = [mb for mb in range(1, M + 1) if M % mb == 0 and mb <= cap]
    if not divisors:
        return 1
    preferred = [mb for mb in divisors if M // mb >= 2]
    return max(preferred) if preferred else max(divisors)


def simularity_matrix(H, H0, weight, *, mb=None):
    """H, H0: [M, N, D/2] float32; weight: [D] float32 -> [M, N, N] float32."""
    M, N, Dh = H.shape
    assert H0.shape == (M, N, Dh)
    D = 2 * Dh
    assert weight.shape == (D,)

    if mb is None:
        mb = _pick_mb(M, N, D)
    assert M % mb == 0, "batch-block size must divide M"

    w = weight.astype(jnp.float32)
    w0 = w[:Dh].reshape(1, Dh)   # scale for the H0 half (first in the concat)
    w1 = w[Dh:].reshape(1, Dh)   # scale for the H half

    return pl.pallas_call(
        _sim_kernel,
        out_shape=jax.ShapeDtypeStruct((M, N, N), jnp.float32),
        grid_spec=pltpu.PrefetchScalarGridSpec(
            num_scalar_prefetch=0,
            grid=(M // mb,),
            in_specs=[
                pl.BlockSpec((1, Dh), lambda i: (0, 0)),        # w0 (shared)
                pl.BlockSpec((1, Dh), lambda i: (0, 0)),        # w1 (shared)
                pl.BlockSpec((mb, N, Dh), lambda i: (i, 0, 0)),  # H0 block
                pl.BlockSpec((mb, N, Dh), lambda i: (i, 0, 0)),  # H block
            ],
            out_specs=pl.BlockSpec((mb, N, N), lambda i: (i, 0, 0)),
        ),
        compiler_params=pltpu.CompilerParams(
            dimension_semantics=("parallel",)),
    )(w0, w1, H0.astype(jnp.float32), H.astype(jnp.float32))


def _reference(H, H0, weight):
    Z = jnp.concatenate((H0, H), axis=2)
    mean = jnp.mean(Z, axis=2, keepdims=True)
    std = jnp.std(Z, axis=2, keepdims=True, ddof=1)
    Zn = (Z - mean) / std
    theta = jnp.diag(weight)
    return jnp.einsum('mnd,de,mke->mnk', Zn, theta, Zn)


if __name__ == "__main__":
    # Case 1: module-consistent small shapes (batch=2, nodes=8, in_features=32)
    M, N, D_half = 2, 8, 16
    in_features = 2 * D_half  # 32

    key = jax.random.PRNGKey(0)
    k_h, k_h0, k_w = jax.random.split(key, 3)

    H = jax.random.normal(k_h, (M, N, D_half), dtype=jnp.float32)
    H0 = jax.random.normal(k_h0, (M, N, D_half), dtype=jnp.float32)

    # reset_parameters(): stdv = 1.0 / in_features / 2 ; uniform(-stdv, stdv)
    stdv = 1.0 / in_features / 2.0
    weight = jax.random.uniform(
        k_w, (in_features,), minval=-stdv, maxval=stdv, dtype=jnp.float32)

    out = jax.block_until_ready(simularity_matrix(H, H0, weight))
    ref = _reference(H, H0, weight)
    assert out.shape == (M, N, N)
    assert jnp.allclose(out, ref, atol=1e-5, rtol=1e-5), "case1 mismatch"

    # Case 2: exercise batch-blocking (MB > 1) on slightly larger shapes.
    M2, N2, Dh2 = 8, 16, 32
    k_h2, k_h02, k_w2 = jax.random.split(jax.random.PRNGKey(1), 3)
    H2 = jax.random.normal(k_h2, (M2, N2, Dh2), dtype=jnp.float32)
    H02 = jax.random.normal(k_h02, (M2, N2, Dh2), dtype=jnp.float32)
    w2 = jax.random.uniform(
        k_w2, (2 * Dh2,), minval=-stdv, maxval=stdv, dtype=jnp.float32)

    out2 = jax.block_until_ready(simularity_matrix(H2, H02, w2, mb=4))
    ref2 = _reference(H2, H02, w2)
    assert out2.shape == (M2, N2, N2)
    assert jnp.allclose(out2, ref2, atol=1e-4, rtol=1e-4), "case2 mismatch"

    print("KERNEL_OK")
</pallas_src>

<mosaic_0001>
module attributes {stable_mosaic.version = 11 : i64} {
  func.func @_sim_kernel(%arg0: i32, %arg1: memref<1x16xf32, #tpu.memory_space<vmem>>, %arg2: memref<1x16xf32, #tpu.memory_space<vmem>>, %arg3: memref<1x8x16xf32, #tpu.memory_space<vmem>>, %arg4: memref<1x8x16xf32, #tpu.memory_space<vmem>>, %arg5: memref<1x8x8xf32, #tpu.memory_space<vmem>>) attributes {dimension_semantics = [#tpu.dimension_semantics<parallel>], iteration_bounds = array<i64: 2>, scalar_prefetch = 0 : i64, scratch_operands = 0 : i64, tpu.core_type = #tpu.core_type<tc>, window_params = [{pipeline_mode = #tpu.pipeline_mode<synchronous>, transform_indices = @transform_0, window_bounds = array<i64: 1, 16>}, {pipeline_mode = #tpu.pipeline_mode<synchronous>, transform_indices = @transform_1, window_bounds = array<i64: 1, 16>}, {transform_indices = @transform_2, window_bounds = array<i64: 1, 8, 16>}, {transform_indices = @transform_3, window_bounds = array<i64: 1, 8, 16>}, {transform_indices = @transform_4, window_bounds = array<i64: 1, 8, 8>}]} {
    %c0 = arith.constant 0 : index
    %c0_0 = arith.constant 0 : index
    %c0_1 = arith.constant 0 : index
    %0 = vector.load %arg3[%c0, %c0_0, %c0_1] : memref<1x8x16xf32, #tpu.memory_space<vmem>>, vector<1x8x16xf32>
    %c0_2 = arith.constant 0 : index
    %c0_3 = arith.constant 0 : index
    %c0_4 = arith.constant 0 : index
    %1 = vector.load %arg4[%c0_2, %c0_3, %c0_4] : memref<1x8x16xf32, #tpu.memory_space<vmem>>, vector<1x8x16xf32>
    %cst = arith.constant dense<0.000000e+00> : vector<1x8xf32>
    %2 = vector.multi_reduction <add>, %0, %cst [2] : vector<1x8x16xf32> to vector<1x8xf32>
    %3 = vector.shape_cast %2 : vector<1x8xf32> to vector<1x8x1xf32>
    %cst_5 = arith.constant dense<0.000000e+00> : vector<1x8xf32>
    %4 = vector.multi_reduction <add>, %1, %cst_5 [2] : vector<1x8x16xf32> to vector<1x8xf32>
    %5 = vector.shape_cast %4 : vector<1x8xf32> to vector<1x8x1xf32>
    %6 = arith.addf %3, %5 : vector<1x8x1xf32>
    %cst_6 = arith.constant 3.125000e-02 : f32
    %7 = vector.broadcast %cst_6 : f32 to vector<1x8x1xf32>
    %8 = arith.mulf %6, %7 : vector<1x8x1xf32>
    %9 = vector.broadcast %8 : vector<1x8x1xf32> to vector<1x8x16xf32>
    %10 = arith.subf %0, %9 : vector<1x8x16xf32>
    %11 = vector.broadcast %8 : vector<1x8x1xf32> to vector<1x8x16xf32>
    %12 = arith.subf %1, %11 : vector<1x8x16xf32>
    %13 = arith.mulf %10, %10 : vector<1x8x16xf32>
    %cst_7 = arith.constant dense<0.000000e+00> : vector<1x8xf32>
    %14 = vector.multi_reduction <add>, %13, %cst_7 [2] : vector<1x8x16xf32> to vector<1x8xf32>
    %15 = vector.shape_cast %14 : vector<1x8xf32> to vector<1x8x1xf32>
    %16 = arith.mulf %12, %12 : vector<1x8x16xf32>
    %cst_8 = arith.constant dense<0.000000e+00> : vector<1x8xf32>
    %17 = vector.multi_reduction <add>, %16, %cst_8 [2] : vector<1x8x16xf32> to vector<1x8xf32>
    %18 = vector.shape_cast %17 : vector<1x8xf32> to vector<1x8x1xf32>
    %19 = arith.addf %15, %18 : vector<1x8x1xf32>
    %cst_9 = arith.constant 0.0322580636 : f32
    %20 = vector.broadcast %cst_9 : f32 to vector<1x8x1xf32>
    %21 = arith.mulf %19, %20 : vector<1x8x1xf32>
    %22 = math.rsqrt %21 : vector<1x8x1xf32>
    %23 = vector.broadcast %22 : vector<1x8x1xf32> to vector<1x8x16xf32>
    %24 = arith.mulf %10, %23 : vector<1x8x16xf32>
    %25 = vector.broadcast %22 : vector<1x8x1xf32> to vector<1x8x16xf32>
    %26 = arith.mulf %12, %25 : vector<1x8x16xf32>
    %c0_10 = arith.constant 0 : index
    %c0_11 = arith.constant 0 : index
    %27 = vector.load %arg1[%c0_10, %c0_11] : memref<1x16xf32, #tpu.memory_space<vmem>>, vector<1x16xf32>
    %28 = vector.shape_cast %27 : vector<1x16xf32> to vector<1x1x16xf32>
    %c0_12 = arith.constant 0 : index
    %c0_13 = arith.constant 0 : index
    %29 = vector.load %arg2[%c0_12, %c0_13] : memref<1x16xf32, #tpu.memory_space<vmem>>, vector<1x16xf32>
    %30 = vector.shape_cast %29 : vector<1x16xf32> to vector<1x1x16xf32>
    %31 = vector.broadcast %28 : vector<1x1x16xf32> to vector<1x8x16xf32>
    %32 = arith.mulf %24, %31 : vector<1x8x16xf32>
    "tpu.trace_start"() <{level = 10 : i32, message = "bnd,bkd->bnk"}> : () -> ()
    %cst_14 = arith.constant dense<0.000000e+00> : vector<1x8x8xf32>
    %33 = tpu.matmul %32, %24, %cst_14 {dimension_numbers = #tpu.dot_dimension_numbers<[2], [2], [1], [1], [0, 0, 0, 1, 1, 1], [0], [0]>} : vector<1x8x16xf32>, vector<1x8x16xf32>, vector<1x8x8xf32> -> vector<1x8x8xf32>
    "tpu.trace_stop"() : () -> ()
    %34 = vector.broadcast %30 : vector<1x1x16xf32> to vector<1x8x16xf32>
    %35 = arith.mulf %26, %34 : vector<1x8x16xf32>
    "tpu.trace_start"() <{level = 10 : i32, message = "bnd,bkd->bnk"}> : () -> ()
    %cst_15 = arith.constant dense<0.000000e+00> : vector<1x8x8xf32>
    %36 = tpu.matmul %35, %26, %cst_15 {dimension_numbers = #tpu.dot_dimension_numbers<[2], [2], [1], [1], [0, 0, 0, 1, 1, 1], [0], [0]>} : vector<1x8x16xf32>, vector<1x8x16xf32>, vector<1x8x8xf32> -> vector<1x8x8xf32>
    "tpu.trace_stop"() : () -> ()
    %37 = arith.addf %33, %36 : vector<1x8x8xf32>
    %c0_16 = arith.constant 0 : index
    %c0_17 = arith.constant 0 : index
    %c0_18 = arith.constant 0 : index
    %38 = vector.load %arg5[%c0_16, %c0_17, %c0_18] : memref<1x8x8xf32, #tpu.memory_space<vmem>>, vector<1x8x8xf32>
    tpu.vector_store %arg5[%c0_16, %c0_17, %c0_18], %37 {strides = array<i32>} : memref<1x8x8xf32, #tpu.memory_space<vmem>>, vector<1x8x8xf32>,
    return
  }
  func.func @transform_0(%arg0: i32) -> (i32, i32) {
    %c0_i32 = arith.constant 0 : i32
    %c0_i32_0 = arith.constant 0 : i32
    %c0_i32_1 = arith.constant 0 : i32
    return %c0_i32, %c0_i32_0 : i32, i32
  }
  func.func @transform_1(%arg0: i32) -> (i32, i32) {
    %c0_i32 = arith.constant 0 : i32
    %c0_i32_0 = arith.constant 0 : i32
    %c0_i32_1 = arith.constant 0 : i32
    return %c0_i32, %c0_i32_0 : i32, i32
  }
  func.func @transform_2(%arg0: i32) -> (i32, i32, i32) {
    %c0_i32 = arith.constant 0 : i32
    %c0_i32_0 = arith.constant 0 : i32
    %c0_i32_1 = arith.constant 0 : i32
    return %arg0, %c0_i32, %c0_i32_0 : i32, i32, i32
  }
  func.func @transform_3(%arg0: i32) -> (i32, i32, i32) {
    %c0_i32 = arith.constant 0 : i32
    %c0_i32_0 = arith.constant 0 : i32
    %c0_i32_1 = arith.constant 0 : i32
    return %arg0, %c0_i32, %c0_i32_0 : i32, i32, i32
  }
  func.func @transform_4(%arg0: i32) -> (i32, i32, i32) {
    %c0_i32 = arith.constant 0 : i32
    %c0_i32_0 = arith.constant 0 : i32
    %c0_i32_1 = arith.constant 0 : i32
    return %arg0, %c0_i32, %c0_i32_0 : i32, i32, i32
  }
}

</mosaic_0001>

<llo_original>
// kernel: tpu_custom_call.1
$region0: #{tpu_custom_call.1}
  #allocation0 [shape = 'u32[]', space=smem, size = 0x4, offset = 0x4, fixed_abs, tag = 'smem constant byte address 0x4 - core index']
  #allocation1 [shape = 'u32[144,128]{1,0:T(1,128)}', space=vmem, size = 0x12000, scoped, tag = 'internal scratch']
  %s0 = inlined_call_operand.hbm [shape: f32[1,16], index: 0, kind: input, shape index: {}]
  %s1 = inlined_call_operand.vmem [shape: f32[1,16], index: 1, kind: input, shape index: {}]
  %s2 = inlined_call_operand.hbm [shape: f32[2,8,16], index: 2, kind: input, shape index: {}]
  %s3 = inlined_call_operand.hbm [shape: f32[2,8,16], index: 3, kind: input, shape index: {}]
  %s4 = inlined_call_operand.hbm [shape: f32[2,8,8], index: 4, kind: output, shape index: {}]
  %s5 = sld [smem:[#allocation0]]
  $region61: #{tpu_custom_call.1} parent=0
    _
  %s7 = ssub.s32 1, %s5
  %s8 = scalar_select 0, %s7, %s5
  $region1: #{tpu_custom_call.1} parent=0
    #allocation2 [shape = 'u8[512]{0}', space=vmem, size = 0x400, scoped, tag = 'input window, operand 0, single buffered']
    #allocation3 [shape = 's32[2]{0}', space=sflag, size = 0x8, scoped, tag = 'scoped memory for tpu_custom_call.1']
    #allocation4 [shape = 's32[2]{0}', space=sflag, size = 0x8, scoped, tag = 'scoped memory for tpu_custom_call.1']
    #allocation5 [shape = 'u8[8192]{0}', space=vmem, size = 0x2000, scoped, tag = 'input window, operand 2']
    #allocation6 [shape = 's32[2]{0}', space=sflag, size = 0x8, scoped, tag = 'scoped memory for tpu_custom_call.1']
    #allocation7 [shape = 'u8[8192]{0}', space=vmem, size = 0x2000, scoped, tag = 'input window, operand 3']
    #allocation8 [shape = 'u8[8192]{0}', space=vmem, size = 0x2000, scoped, tag = 'output window, operand 0']
    %9 = vsyncpa [#allocation3], 0
    %10 = vsyncpa [#allocation6], 0
    %s11 = scalar_lea.sflag [#allocation6], 1
    %12 = vsyncpa %s11, 0
    %13 = vsyncpa [#allocation4], 0
    %s14 = scalar_lea.sflag [#allocation4], 1
    %15 = vsyncpa %s14, 0
    loop: start=0, step=1, limit=4
    $region2: #{tpu_custom_call.1} parent=1 // loop_pre_header
      _
    $region3: #{tpu_custom_call.1} parent=1 // loop_header
      %s17 = sphi 0, %s21
      %p18 = scmp.ge.s32.totalorder %s17, 4
      %s25 = sphi 0, %s25
      %s27 = sphi 0, %s25
      %s28 = sphi 0, %s27
      %s42 = sphi 0, %s28
      %s46 = sphi 0, %s46
      %s48 = sphi 0, %s46
      %s49 = sphi 0, %s48
      %s63 = sphi 0, %s49
      %s69 = sphi 0, %s71
      %s72 = sphi 0, %s69
      %s73 = sphi 0, %s72
      %s89 = sphi 0, %s73
      %s95 = sphi 0, %s97
      %s98 = sphi 0, %s95
      %s99 = sphi 0, %s98
      %s115 = sphi 0, %s99
      %s121 = sphi 0, %s123
      %s124 = sphi 0, %s121
      %s125 = sphi 0, %s124
      %s141 = sphi 0, %s125
    $region4: #{tpu_custom_call.1} parent=1 // loop_header_branch
      %20 = sbr.rel (%p18) target = $region8
    $region5: #{tpu_custom_call.1} parent=1 // loop_body
      %s22 = ssub.s32 %s17, 1
      %s23 = ssub.s32 %s17, 2
      %s24 = sadd.s32 %s17, 1
      %s26 = sadd.s32 %s25, 1
      %p29 = scmp.eq.s32.totalorder %s17, 1
      %p30 = scmp.ne.s32.totalorder %s25, %s27
      %p31 = scmp.eq.s32.totalorder %s17, 0
      %p32 = por %p30, %p31
      %p33 = scmp.ne.s32.totalorder %s25, %s27
      %p34 = scmp.eq.s32.totalorder %s22, 1
      %p35 = por %p33, %p34
      %p36 = scmp.ne.s32.totalorder %s27, %s28
      %p37 = scmp.eq.s32.totalorder %s22, 0
      %p38 = por %p36, %p37
      %p39 = scmp.ne.s32.totalorder %s27, %s28
      %p40 = scmp.eq.s32.totalorder %s23, 1
      %p41 = por %p39, %p40
      %p43 = scmp.ne.s32.totalorder %s28, %s42
      %p44 = scmp.eq.s32.totalorder %s23, 0
      %p45 = por %p43, %p44
      %s47 = sadd.s32 %s46, 1
      %p50 = scmp.eq.s32.totalorder %s17, 1
      %p51 = scmp.ne.s32.totalorder %s46, %s48
      %p52 = scmp.eq.s32.totalorder %s17, 0
      %p53 = por %p51, %p52
      %p54 = scmp.ne.s32.totalorder %s46, %s48
      %p55 = scmp.eq.s32.totalorder %s22, 1
      %p56 = por %p54, %p55
      %p57 = scmp.ne.s32.totalorder %s48, %s49
      %p58 = scmp.eq.s32.totalorder %s22, 0
      %p59 = por %p57, %p58
      %p60 = scmp.ne.s32.totalorder %s48, %s49
      %p61 = scmp.eq.s32.totalorder %s23, 1
      %p62 = por %p60, %p61
      %p64 = scmp.ne.s32.totalorder %s49, %s63
      %p65 = scmp.eq.s32.totalorder %s23, 0
      %p66 = por %p64, %p65
      %s67 = ssub.s32 %s17, %s24
      %p68 = scmp.eq.s32.totalorder %s67, 0
      %s70 = sadd.s32 %s69, 1
      %s71 = scalar_select %p68, %s69, %s70
      %p74 = pneg %p68
      %p75 = scmp.eq.s32.totalorder %s17, 1
      %p76 = por %p74, %p75
      %p77 = scmp.ne.s32.totalorder %s69, %s72
      %p78 = scmp.eq.s32.totalorder %s17, 0
      %p79 = por %p77, %p78
      %p80 = scmp.ne.s32.totalorder %s69, %s72
      %p81 = scmp.eq.s32.totalorder %s22, 1
      %p82 = por %p80, %p81
      %p83 = scmp.ne.s32.totalorder %s72, %s73
      %p84 = scmp.eq.s32.totalorder %s22, 0
      %p85 = por %p83, %p84
      %p86 = scmp.ne.s32.totalorder %s72, %s73
      %p87 = scmp.eq.s32.totalorder %s23, 1
      %p88 = por %p86, %p87
      %p90 = scmp.ne.s32.totalorder %s73, %s89
      %p91 = scmp.eq.s32.totalorder %s23, 0
      %p92 = por %p90, %p91
      %s93 = ssub.s32 %s17, %s24
      %p94 = scmp.eq.s32.totalorder %s93, 0
      %s96 = sadd.s32 %s95, 1
      %s97 = scalar_select %p94, %s95, %s96
      %p100 = pneg %p94
      %p101 = scmp.eq.s32.totalorder %s17, 1
      %p102 = por %p100, %p101
      %p103 = scmp.ne.s32.totalorder %s95, %s98
      %p104 = scmp.eq.s32.totalorder %s17, 0
      %p105 = por %p103, %p104
      %p106 = scmp.ne.s32.totalorder %s95, %s98
      %p107 = scmp.eq.s32.totalorder %s22, 1
      %p108 = por %p106, %p107
      %p109 = scmp.ne.s32.totalorder %s98, %s99
      %p110 = scmp.eq.s32.totalorder %s22, 0
      %p111 = por %p109, %p110
      %p112 = scmp.ne.s32.totalorder %s98, %s99
      %p113 = scmp.eq.s32.totalorder %s23, 1
      %p114 = por %p112, %p113
      %p116 = scmp.ne.s32.totalorder %s99, %s115
      %p117 = scmp.eq.s32.totalorder %s23, 0
      %p118 = por %p116, %p117
      %s119 = ssub.s32 %s17, %s24
      %p120 = scmp.eq.s32.totalorder %s119, 0
      %s122 = sadd.s32 %s121, 1
      %s123 = scalar_select %p120, %s121, %s122
      %p126 = pneg %p120
      %p127 = scmp.eq.s32.totalorder %s17, 1
      %p128 = por %p126, %p127
      %p129 = scmp.ne.s32.totalorder %s121, %s124
      %p130 = scmp.eq.s32.totalorder %s17, 0
      %p131 = por %p129, %p130
      %p132 = scmp.ne.s32.totalorder %s121, %s124
      %p133 = scmp.eq.s32.totalorder %s22, 1
      %p134 = por %p132, %p133
      %p135 = scmp.ne.s32.totalorder %s124, %s125
      %p136 = scmp.eq.s32.totalorder %s22, 0
      %p137 = por %p135, %p136
      %p138 = scmp.ne.s32.totalorder %s124, %s125
      %p139 = scmp.eq.s32.totalorder %s23, 1
      %p140 = por %p138, %p139
      %p142 = scmp.ne.s32.totalorder %s125, %s141
      %p143 = scmp.eq.s32.totalorder %s23, 0
      %p144 = por %p142, %p143
      %p145 = scmp.le.s32.totalorder 1, %s17
      %p146 = scmp.lt.s32.totalorder %s17, 3
      %p147 = pnand %p145, %p146
      %p148 = pneg %p147
      // Predicated region
      $region9: #{tpu_custom_call.1} parent=5 // pred_check
        _
      $region10: #{tpu_custom_call.1} parent=5 // pred_check_branch
        %150 = sbr.rel (%p147) target = $region12
      $region11: #{tpu_custom_call.1} parent=5 // pred_region
        %s151 = ssub.s32 %s17, 1
        // Predicated region
        $region13: #{tpu_custom_call.1} parent=11 // pred_check
          %p152 = pneg %p38
        $region14: #{tpu_custom_call.1} parent=11 // pred_check_branch
          %154 = sbr.rel (%p152) target = $region16
        $region15: #{tpu_custom_call.1} parent=11 // pred_region
          %s156 = ssub.s32 16, 16
          %157 = vsyncadd [#allocation3], %s156
          %s159 = sshll.u32 [#allocation2], 4
          %s160 = int_to_ptr.vmem [resolvable:$true] %s159
          %162 = dma.hbm_to_vmem [thread:$0]  %s0, 16, %s160, [#allocation3]
        $region16: #{tpu_custom_call.1} parent=11 // pred_fallthru
          _
        // Predicated region
        $region17: #{tpu_custom_call.1} parent=11 // pred_check
          %p163 = pneg %p59
        $region18: #{tpu_custom_call.1} parent=11 // pred_check_branch
          %165 = sbr.rel (%p163) target = $region20
        $region19: #{tpu_custom_call.1} parent=11 // pred_region
          _
        $region20: #{tpu_custom_call.1} parent=11 // pred_fallthru
          _
      $region12: #{tpu_custom_call.1} parent=5 // pred_fallthru
        _
      %p166 = scmp.lt.s32.totalorder %s17, 2
      // Predicated region
      $region21: #{tpu_custom_call.1} parent=5 // pred_check
        %p167 = pneg %p166
      $region22: #{tpu_custom_call.1} parent=5 // pred_check_branch
        %169 = sbr.rel (%p167) target = $region24
      $region23: #{tpu_custom_call.1} parent=5 // pred_region
        // Predicated region
        $region25: #{tpu_custom_call.1} parent=23 // pred_check
          %p170 = pneg %p79
        $region26: #{tpu_custom_call.1} parent=23 // pred_check_branch
          %172 = sbr.rel (%p170) target = $region28
        $region27: #{tpu_custom_call.1} parent=23 // pred_region
          %s173 = sand.u32 %s17, 1
          %s174 = scalar_lea.sflag [#allocation6], %s173
          %s175 = sand.u32 %s69, 1
          %s176 = smul.addr %s175, 8
          %s177 = scalar_lea.vmem [#allocation5], %s176
          %s179 = ssub.s32 128, 128
          %180 = vsyncadd %s174, %s179
          %s181 = smul.addr %s17, 128
          %s182 = scalar_lea.hbm %s2, %s181
          %s184 = sshll.u32 %s177, 4
          %s185 = int_to_ptr.vmem [resolvable:$true] %s184
          %187 = dma.hbm_to_vmem [thread:$0]  %s182, 128, %s185, %s174
        $region28: #{tpu_custom_call.1} parent=23 // pred_fallthru
          _
        // Predicated region
        $region29: #{tpu_custom_call.1} parent=23 // pred_check
          %p188 = pneg %p105
        $region30: #{tpu_custom_call.1} parent=23 // pred_check_branch
          %190 = sbr.rel (%p188) target = $region32
        $region31: #{tpu_custom_call.1} parent=23 // pred_region
          %s191 = sand.u32 %s17, 1
          %s192 = scalar_lea.sflag [#allocation6], %s191
          %s193 = sand.u32 %s95, 1
          %s194 = smul.addr %s193, 8
          %s195 = scalar_lea.vmem [#allocation7], %s194
          %s197 = ssub.s32 128, 128
          %198 = vsyncadd %s192, %s197
          %s199 = smul.addr %s17, 128
          %s200 = scalar_lea.hbm %s3, %s199
          %s202 = sshll.u32 %s195, 4
          %s203 = int_to_ptr.vmem [resolvable:$true] %s202
          %205 = dma.hbm_to_vmem [thread:$0]  %s200, 128, %s203, %s192
        $region32: #{tpu_custom_call.1} parent=23 // pred_fallthru
          _
      $region24: #{tpu_custom_call.1} parent=5 // pred_fallthru
        _
      %p206 = scmp.le.s32.totalorder 1, %s17
      %p207 = scmp.lt.s32.totalorder %s17, 3
      %p208 = pnand %p206, %p207
      %p209 = pneg %p208
      // Predicated region
      $region33: #{tpu_custom_call.1} parent=5 // pred_check
        _
      $region34: #{tpu_custom_call.1} parent=5 // pred_check_branch
        %211 = sbr.rel (%p208) target = $region36
      $region35: #{tpu_custom_call.1} parent=5 // pred_region
        %s212 = ssub.s32 %s17, 1
        // Predicated region
        $region37: #{tpu_custom_call.1} parent=35 // pred_check
          %p213 = pneg %p38
        $region38: #{tpu_custom_call.1} parent=35 // pred_check_branch
          %215 = sbr.rel (%p213) target = $region40
        $region39: #{tpu_custom_call.1} parent=35 // pred_region
          %216 = dma.done [#allocation3], 16
        $region40: #{tpu_custom_call.1} parent=35 // pred_fallthru
          _
        %s217 = sand.u32 %s22, 1
        %s218 = scalar_lea.sflag [#allocation6], %s217
        %s219 = sand.u32 %s72, 1
        %s220 = smul.addr %s219, 8
        %s221 = scalar_lea.vmem [#allocation5], %s220
        // Predicated region
        $region41: #{tpu_custom_call.1} parent=35 // pred_check
          %p222 = pneg %p85
        $region42: #{tpu_custom_call.1} parent=35 // pred_check_branch
          %224 = sbr.rel (%p222) target = $region44
        $region43: #{tpu_custom_call.1} parent=35 // pred_region
          %225 = dma.done %s218, 128
        $region44: #{tpu_custom_call.1} parent=35 // pred_fallthru
          _
        %s226 = sand.u32 %s22, 1
        %s227 = scalar_lea.sflag [#allocation6], %s226
        %s228 = sand.u32 %s98, 1
        %s229 = smul.addr %s228, 8
        %s230 = scalar_lea.vmem [#allocation7], %s229
        // Predicated region
        $region45: #{tpu_custom_call.1} parent=35 // pred_check
          %p231 = pneg %p111
        $region46: #{tpu_custom_call.1} parent=35 // pred_check_branch
          %233 = sbr.rel (%p231) target = $region48
        $region47: #{tpu_custom_call.1} parent=35 // pred_region
          %234 = dma.done %s227, 128
        $region48: #{tpu_custom_call.1} parent=35 // pred_fallthru
          _
        %p235 = pneg %p38
        %p236 = pneg %p35
        %p237 = pneg %p59
        %p238 = pneg %p56
        %s239 = sand.u32 %s22, 1
        %s240 = scalar_lea.sflag [#allocation6], %s239
        %s241 = sand.u32 %s72, 1
        %s242 = smul.addr %s241, 8
        %s243 = scalar_lea.vmem [#allocation5], %s242
        %p244 = pneg %p85
        %p245 = pneg %p82
        %s246 = sand.u32 %s22, 1
        %s247 = scalar_lea.sflag [#allocation6], %s246
        %s248 = sand.u32 %s98, 1
        %s249 = smul.addr %s248, 8
        %s250 = scalar_lea.vmem [#allocation7], %s249
        %p251 = pneg %p111
        %p252 = pneg %p108
        %p253 = pneg %p137
        %p254 = pneg %p134
        %s255 = sand.u32 %s124, 1
        %s256 = scalar_lea.sflag [#allocation4], %s255
        %s257 = sand.u32 %s124, 1
        %s258 = smul.addr %s257, 8
        %s259 = scalar_lea.vmem [#allocation8], %s258
        %v260 = vld [vmem:[%s221] sm:$0xff]
        %v261 = vld [vmem:[%s230] sm:$0xff]
        %vm262 = vcmask 130048
        %v263 = vsel %vm262, %v260, 0.0
        %264 = vadd.xlane.f32.xlu0 %v263
        %v265 = vpop.xlane.xlu0 %264
        %v266 = vsel %vm262, %v261, 0.0
        %267 = vadd.xlane.f32.xlu0 %v266
        %v268 = vpop.xlane.xlu0 %267
        %v269 = vadd.f32 %v265, %v268
        %v270 = vmul.f32 %v269, 0.03125
        %v271 = vsub.f32 %v260, %v270
        %v272 = vsub.f32 %v261, %v270
        %v273 = vmul.f32 %v271, %v271
        %v274 = vsel %vm262, %v273, 0.0
        %275 = vadd.xlane.f32.xlu0 %v274
        %v276 = vpop.xlane.xlu0 %275
        %v277 = vmul.f32 %v272, %v272
        %v278 = vsel %vm262, %v277, 0.0
        %279 = vadd.xlane.f32.xlu0 %v278
        %v280 = vpop.xlane.xlu0 %279
        %v281 = vadd.f32 %v276, %v280
        %v282 = vmul.f32 %v281, 0.032258064
        %v283 = vrsqrt.pop %v282
        %v284 = vmul.f32 %v271, %v283
        %v285 = vmul.f32 %v272, %v283
        %v286 = vld [vmem:[#allocation2] sm:$0x1]
        %v287 = vld [vmem:[%s1] sm:$0x1]
        %v289 = vlaneseq
        %v290 = vshrl.u32 %v289, 7
        %v291 = vsub.s32 0, %v290
        %v292 = vrot.slane %v286, %v291
        %v294 = vmul.f32 %v284, %v292
        %v296 = vlaneseq
        %v297 = vshrl.u32 %v296, 7
        %v298 = vsub.s32 0, %v297
        %v299 = vrot.slane %v287, %v298
        %v301 = vmul.f32 %v285, %v299
        %v303 = vsel %vm262, %v301, 0
        %v306 = vsel %vm262, %v285, 0
        %308 = vmatprep.subr.mxu0 0.0
        %309 = vmatpush1.xpose.msra.mxu0 0.0
        %310 = vmatprep.subr.mxu0 0.0
        %311 = vmatpush1.xpose.msra.mxu0 0.0
        %312 = vmatprep.subr.mxu0 0.0
        %313 = vmatpush1.xpose.msra.mxu0 0.0
        %314 = vmatprep.subr.mxu0 0.0
        %315 = vmatpush1.xpose.msra.mxu0 0.0
        %316 = vmatprep.subr.mxu0 0.0
        %317 = vmatpush1.xpose.msra.mxu0 0.0
        %318 = vmatprep.subr.mxu0 0.0
        %319 = vmatpush1.xpose.msra.mxu0 0.0
        %320 = vmatprep.subr.mxu0 0.0
        %321 = vmatpush1.xpose.msra.mxu0 0.0
        %322 = vmatprep.subr.mxu0 0.0
        %323 = vmatpush1.xpose.msra.mxu0 0.0
        %324 = vmatprep.subr.mxu0 0.0
        %325 = vmatpush1.xpose.msra.mxu0 0.0
        %326 = vmatprep.subr.mxu0 0.0
        %327 = vmatpush1.xpose.msra.mxu0 0.0
        %328 = vmatprep.subr.mxu0 0.0
        %329 = vmatpush1.xpose.msra.mxu0 0.0
        %330 = vmatprep.subr.mxu0 0.0
        %331 = vmatpush1.xpose.msra.mxu0 0.0
        %332 = vmatprep.subr.mxu0 0.0
        %333 = vmatpush1.xpose.msra.mxu0 0.0
        %334 = vmatprep.subr.mxu0 0.0
        %335 = vmatpush1.xpose.msra.mxu0 0.0
        %336 = vmatprep.subr.mxu0 0.0
        %337 = vmatpush1.xpose.msra.mxu0 0.0
        %338 = vmatprep.subr.mxu0 0.0
        %339 = vmatpush1.xpose.msra.mxu0 %v306
        %340 = vmatprep.subr.mxu0 0.0
        %341 = vmatpush2.xpose.msra.mxu0 0.0
        %342 = vmatprep.subr.mxu0 0.0
        %343 = vmatpush2.xpose.msra.mxu0 0.0
        %344 = vmatprep.subr.mxu0 0.0
        %345 = vmatpush2.xpose.msra.mxu0 0.0
        %346 = vmatprep.subr.mxu0 0.0
        %347 = vmatpush2.xpose.msra.mxu0 0.0
        %348 = vmatprep.subr.mxu0 0.0
        %349 = vmatpush2.xpose.msra.mxu0 0.0
        %350 = vmatprep.subr.mxu0 0.0
        %351 = vmatpush2.xpose.msra.mxu0 0.0
        %352 = vmatprep.subr.mxu0 0.0
        %353 = vmatpush2.xpose.msra.mxu0 0.0
        %354 = vmatprep.subr.mxu0 0.0
        %355 = vmatpush2.xpose.msra.mxu0 0.0
        %356 = vmatprep.subr.mxu0 0.0
        %357 = vmatpush2.xpose.msra.mxu0 0.0
        %358 = vmatprep.subr.mxu0 0.0
        %359 = vmatpush2.xpose.msra.mxu0 0.0
        %360 = vmatprep.subr.mxu0 0.0
        %361 = vmatpush2.xpose.msra.mxu0 0.0
        %362 = vmatprep.subr.mxu0 0.0
        %363 = vmatpush2.xpose.msra.mxu0 0.0
        %364 = vmatprep.subr.mxu0 0.0
        %365 = vmatpush2.xpose.msra.mxu0 0.0
        %366 = vmatprep.subr.mxu0 0.0
        %367 = vmatpush2.xpose.msra.mxu0 0.0
        %368 = vmatprep.subr.mxu0 0.0
        %369 = vmatpush2.xpose.msra.mxu0 0.0
        %370 = vmatprep.subr.mxu0 0.0
        %371 = vmatpush2.xpose.msra.mxu0 0.0
        %372 = vmatprep.mubr.f32.mxu0 0.0
        %373 = vmatmul.mubr.f32.gmra.mxu0 %v303
        %v374 = vpop.f32.mrf.mxu0
        %v375 = vadd.f32 0.0, %v374
        %v376 = vpop.f32.mrf.mxu0
        %377 = vdwg.mxu0
        %v379 = vsel %vm262, %v294, 0
        %v382 = vsel %vm262, %v284, 0
        %384 = vmatprep.subr.mxu0 0.0
        %385 = vmatpush1.xpose.msra.mxu0 0.0
        %386 = vmatprep.subr.mxu0 0.0
        %387 = vmatpush1.xpose.msra.mxu0 0.0
        %388 = vmatprep.subr.mxu0 0.0
        %389 = vmatpush1.xpose.msra.mxu0 0.0
        %390 = vmatprep.subr.mxu0 0.0
        %391 = vmatpush1.xpose.msra.mxu0 0.0
        %392 = vmatprep.subr.mxu0 0.0
        %393 = vmatpush1.xpose.msra.mxu0 0.0
        %394 = vmatprep.subr.mxu0 0.0
        %395 = vmatpush1.xpose.msra.mxu0 0.0
        %396 = vmatprep.subr.mxu0 0.0
        %397 = vmatpush1.xpose.msra.mxu0 0.0
        %398 = vmatprep.subr.mxu0 0.0
        %399 = vmatpush1.xpose.msra.mxu0 0.0
        %400 = vmatprep.subr.mxu0 0.0
        %401 = vmatpush1.xpose.msra.mxu0 0.0
        %402 = vmatprep.subr.mxu0 0.0
        %403 = vmatpush1.xpose.msra.mxu0 0.0
        %404 = vmatprep.subr.mxu0 0.0
        %405 = vmatpush1.xpose.msra.mxu0 0.0
        %406 = vmatprep.subr.mxu0 0.0
        %407 = vmatpush1.xpose.msra.mxu0 0.0
        %408 = vmatprep.subr.mxu0 0.0
        %409 = vmatpush1.xpose.msra.mxu0 0.0
        %410 = vmatprep.subr.mxu0 0.0
        %411 = vmatpush1.xpose.msra.mxu0 0.0
        %412 = vmatprep.subr.mxu0 0.0
        %413 = vmatpush1.xpose.msra.mxu0 0.0
        %414 = vmatprep.subr.mxu0 0.0
        %415 = vmatpush1.xpose.msra.mxu0 %v382
        %416 = vmatprep.subr.mxu0 0.0
        %417 = vmatpush2.xpose.msra.mxu0 0.0
        %418 = vmatprep.subr.mxu0 0.0
        %419 = vmatpush2.xpose.msra.mxu0 0.0
        %420 = vmatprep.subr.mxu0 0.0
        %421 = vmatpush2.xpose.msra.mxu0 0.0
        %422 = vmatprep.subr.mxu0 0.0
        %423 = vmatpush2.xpose.msra.mxu0 0.0
        %424 = vmatprep.subr.mxu0 0.0
        %425 = vmatpush2.xpose.msra.mxu0 0.0
        %426 = vmatprep.subr.mxu0 0.0
        %427 = vmatpush2.xpose.msra.mxu0 0.0
        %428 = vmatprep.subr.mxu0 0.0
        %429 = vmatpush2.xpose.msra.mxu0 0.0
        %430 = vmatprep.subr.mxu0 0.0
        %431 = vmatpush2.xpose.msra.mxu0 0.0
        %432 = vmatprep.subr.mxu0 0.0
        %433 = vmatpush2.xpose.msra.mxu0 0.0
        %434 = vmatprep.subr.mxu0 0.0
        %435 = vmatpush2.xpose.msra.mxu0 0.0
        %436 = vmatprep.subr.mxu0 0.0
        %437 = vmatpush2.xpose.msra.mxu0 0.0
        %438 = vmatprep.subr.mxu0 0.0
        %439 = vmatpush2.xpose.msra.mxu0 0.0
        %440 = vmatprep.subr.mxu0 0.0
        %441 = vmatpush2.xpose.msra.mxu0 0.0
        %442 = vmatprep.subr.mxu0 0.0
        %443 = vmatpush2.xpose.msra.mxu0 0.0
        %444 = vmatprep.subr.mxu0 0.0
        %445 = vmatpush2.xpose.msra.mxu0 0.0
        %446 = vmatprep.subr.mxu0 0.0
        %447 = vmatpush2.xpose.msra.mxu0 0.0
        %448 = vmatprep.mubr.f32.mxu0 0.0
        %449 = vmatmul.mubr.f32.gmra.mxu0 %v379
        %v450 = vpop.f32.mrf.mxu0
        %v451 = vadd.f32 %v375, %v450
        %v452 = vpop.f32.mrf.mxu0
        %453 = vdwg.mxu0
        %vm454 = vcmask 64512
        %455 = vst.msk [vmem:[%s259] sm:$0xff] %vm454, %v451
        %s456 = sand.u32 %s124, 1
        %s457 = scalar_lea.sflag [#allocation4], %s456
        %s458 = sand.u32 %s124, 1
        %s459 = smul.addr %s458, 8
        %s460 = scalar_lea.vmem [#allocation8], %s459
        // Predicated region
        $region49: #{tpu_custom_call.1} parent=35 // pred_check
          %p461 = pneg %p134
        $region50: #{tpu_custom_call.1} parent=35 // pred_check_branch
          %463 = sbr.rel (%p461) target = $region52
        $region51: #{tpu_custom_call.1} parent=35 // pred_region
          %s465 = ssub.s32 128, 128
          %466 = vsyncadd %s457, %s465
          %s467 = smul.addr %s22, 128
          %s468 = scalar_lea.hbm %s4, %s467
          %s470 = sshll.u32 %s460, 4
          %s471 = int_to_ptr.vmem [resolvable:$true] %s470
          %473 = dma.vmem_to_hbm [thread:$0]  %s471, 128, %s468, %s457
        $region52: #{tpu_custom_call.1} parent=35 // pred_fallthru
          _
      $region36: #{tpu_custom_call.1} parent=5 // pred_fallthru
        _
      %p474 = scmp.le.s32.totalorder 2, %s17
      // Predicated region
      $region53: #{tpu_custom_call.1} parent=5 // pred_check
        %p475 = pneg %p474
      $region54: #{tpu_custom_call.1} parent=5 // pred_check_branch
        %477 = sbr.rel (%p475) target = $region56
      $region55: #{tpu_custom_call.1} parent=5 // pred_region
        %s478 = ssub.s32 %s17, 2
        // Predicated region
        $region57: #{tpu_custom_call.1} parent=55 // pred_check
          %p479 = pneg %p140
        $region58: #{tpu_custom_call.1} parent=55 // pred_check_branch
          %481 = sbr.rel (%p479) target = $region60
        $region59: #{tpu_custom_call.1} parent=55 // pred_region
          %s482 = sand.u32 %s125, 1
          %s483 = scalar_lea.sflag [#allocation4], %s482
          %s484 = sand.u32 %s125, 1
          %s485 = smul.addr %s484, 8
          %s486 = scalar_lea.vmem [#allocation8], %s485
          %487 = dma.done %s483, 128
        $region60: #{tpu_custom_call.1} parent=55 // pred_fallthru
          _
      $region56: #{tpu_custom_call.1} parent=5 // pred_fallthru
        _
    $region6: #{tpu_custom_call.1} parent=1 // loop_footer
      %s21 = sadd.s32 1, %s17
    $region7: #{tpu_custom_call.1} parent=1 // loop_footer_branch
      %16 = sbr.rel target = $region3
    $region8: #{tpu_custom_call.1} parent=1 // loop_exit
      _
    %488 = vsyncpa [#allocation3], 1
    %s489 = scalar_lea.sflag [#allocation3], 1
    %490 = vsyncpa %s489, 1
    %491 = vsyncpa [#allocation6], 1
    %s492 = scalar_lea.sflag [#allocation6], 1
    %493 = vsyncpa %s492, 1
    %494 = vsyncpa [#allocation4], 1
    %s495 = scalar_lea.sflag [#allocation4], 1
    %496 = vsyncpa %s495, 1

</llo_original>
